<compile_context>
chip_gen: v6e
topology: v6e:2x2x1
jax: 0.10.0
libtpu: 0.0.40
codegen_flags: <defaults>
</compile_context>

<pallas_src>
import functools

import jax
import jax.numpy as jnp
from jax.experimental import pallas as pl
from jax.experimental.pallas import tpu as pltpu


def _round_up(x, m):
    return (x + m - 1) // m * m


# --------------------------------------------------------------------------- #
# Kernel
# --------------------------------------------------------------------------- #
def cdae_kernel(seed_ref, x_ref, w_enc_ref, b_enc_ref, u_emb_ref,
                w_dec_ref, b_dec_ref, out_ref, h_acc_ref, *,
                ni, corruption_ratio, training):
    i = pl.program_id(0)        # batch tile
    j = pl.program_id(1)        # phase-combined item tile: [0, ni) enc, [ni, 2ni) dec

    # ---------------- encoder phase: accumulate h = x @ W_enc.T ----------------
    @pl.when(j == 0)
    def _():
        h_acc_ref[...] = jnp.zeros_like(h_acc_ref)

    @pl.when(j < ni)
    def _():
        x = x_ref[...]                                          # [Bt, It]
        if training and corruption_ratio > 0.0:
            # Inverted dropout; per-tile seed so every (batch, item) tile gets a
            # distinct mask.  TODO(synk): TPU PRNG stream differs from torch's
            # nn.Dropout stream (semantics match, exact randoms do not).
            pltpu.prng_seed(seed_ref[0] + i * ni + j)
            bits = pltpu.prng_random_bits(x.shape)
            u01 = (bits & 0xFFFFFF).astype(jnp.float32) * (1.0 / (1 << 24))
            scale = 1.0 / (1.0 - corruption_ratio)
            x = x * jnp.where(u01 >= corruption_ratio, scale, 0.0).astype(x.dtype)
        h_acc_ref[...] += jnp.dot(x, w_enc_ref[...],
                                  preferred_element_type=jnp.float32)

    @pl.when(j == ni - 1)
    def _():
        h = h_acc_ref[...] + b_enc_ref[...] + u_emb_ref[...]
        h_acc_ref[...] = jnp.maximum(h, 0.0)                    # ReLU

    # ---------------- decoder phase: out tile = h @ W_dec.T + b_dec ------------
    @pl.when(j >= ni)
    def _():
        h = h_acc_ref[...].astype(w_dec_ref.dtype)              # bf16 MXU input
        out = jnp.dot(h, w_dec_ref[...], preferred_element_type=jnp.float32)
        out_ref[...] = (out + b_dec_ref[...]).astype(out_ref.dtype)


# --------------------------------------------------------------------------- #
# One-time parameter preparation (outside the hot path)
# --------------------------------------------------------------------------- #
def prepare_cdae_params(params, *, weight_dtype=jnp.bfloat16):
    """Convert torch-layout params (W_enc [H,I], W_dec [I,H]) once into
    pre-transposed, 128-lane-padded, bf16 kernel layout."""
    w_enc, b_enc, emb, w_dec, b_dec = params
    H, I = w_enc.shape
    U = emb.shape[0]
    Hp = _round_up(H, 128)
    Ip = _round_up(I, 128)

    w_enc_t = jnp.zeros((Ip, Hp), weight_dtype).at[:I, :H].set(
        w_enc.T.astype(weight_dtype))                           # [I, H]
    w_dec_t = jnp.zeros((Hp, Ip), weight_dtype).at[:H, :I].set(
        w_dec.T.astype(weight_dtype))                           # [H, I]
    b_enc_p = jnp.zeros((1, Hp), jnp.float32).at[0, :H].set(b_enc.astype(jnp.float32))
    b_dec_p = jnp.zeros((1, Ip), jnp.float32).at[0, :I].set(b_dec.astype(jnp.float32))
    emb_p = jnp.zeros((U, Hp), jnp.float32).at[:, :H].set(emb.astype(jnp.float32))
    return dict(w_enc_t=w_enc_t, w_dec_t=w_dec_t, b_enc=b_enc_p, b_dec=b_dec_p,
                emb=emb_p, num_items=int(I), hidden=int(H))


# --------------------------------------------------------------------------- #
# Forward wrapper
# --------------------------------------------------------------------------- #
def cdae_forward(user_idx, x, prepared, *, corruption_ratio=0.0, training=False,
                 seed=0, b_tile=None, i_tile=512):
    w_enc_t = prepared["w_enc_t"]
    w_dec_t = prepared["w_dec_t"]
    b_enc = prepared["b_enc"]
    b_dec = prepared["b_dec"]
    emb = prepared["emb"]
    I = prepared["num_items"]
    Ip, Hp = w_enc_t.shape
    B = x.shape[0]

    # ---- tile plan (lane-dense multiples of 128 / sublane multiples of 8) ----
    i_tile = max(128, min(_round_up(int(i_tile), 128), Ip))
    while Ip % i_tile != 0:
        i_tile -= 128
    Bp = _round_up(B, 8)
    if b_tile is None:
        b_tile = min(Bp, 256)
    b_tile = min(_round_up(int(b_tile), 8), Bp)
    Bp = _round_up(Bp, b_tile)
    nb = Bp // b_tile
    ni = Ip // i_tile

    # ---- glue: pad activations, gather user embeddings ----
    w_bytes = jnp.dtype(w_enc_t.dtype).itemsize
    x_p = jnp.zeros((Bp, Ip), w_enc_t.dtype).at[:B, :I].set(x.astype(w_enc_t.dtype))
    u_emb = jnp.zeros((Bp, Hp), jnp.float32).at[:B].set(emb[user_idx])
    seed_arr = jnp.asarray([seed], dtype=jnp.int32)

    # ---- explicit VMEM budget (double-buffered blocks + h scratch, 2x headroom)
    est = 2 * (b_tile * i_tile * w_bytes        # x block
               + i_tile * Hp * w_bytes          # W_enc.T block
               + Hp * 4                         # b_enc
               + b_tile * Hp * 4                # u_emb block
               + Hp * i_tile * w_bytes          # W_dec.T block
               + i_tile * 4                     # b_dec block
               + b_tile * i_tile * 4)           # out block
    est += b_tile * Hp * 4                      # h accumulator scratch
    vmem_limit = int(min(max(2 * est, 8 << 20), 64 << 20))

    kernel = functools.partial(cdae_kernel, ni=ni,
                               corruption_ratio=float(corruption_ratio),
                               training=bool(training))

    out_p = pl.pallas_call(
        kernel,
        out_shape=jax.ShapeDtypeStruct((Bp, Ip), jnp.float32),
        grid_spec=pltpu.PrefetchScalarGridSpec(
            num_scalar_prefetch=1,              # dropout seed lives in SMEM
            grid=(nb, 2 * ni),                  # (batch tiles, enc+dec item tiles)
            in_specs=[
                # x: advances with encoder item tile, frozen during decoder phase
                pl.BlockSpec((b_tile, i_tile),
                             lambda i, j, s: (i, jnp.minimum(j, ni - 1))),
                # W_enc.T: same — re-used across batch tiles per item tile
                pl.BlockSpec((i_tile, Hp),
                             lambda i, j, s: (jnp.minimum(j, ni - 1), 0)),
                # b_enc: fully resident
                pl.BlockSpec((1, Hp), lambda i, j, s: (0, 0)),
                # user embeddings: resident per batch tile
                pl.BlockSpec((b_tile, Hp), lambda i, j, s: (i, 0)),
                # W_dec.T: advances only during decoder phase
                pl.BlockSpec((Hp, i_tile),
                             lambda i, j, s: (0, jnp.maximum(j - ni, 0))),
                # b_dec: advances only during decoder phase
                pl.BlockSpec((1, i_tile),
                             lambda i, j, s: (0, jnp.maximum(j - ni, 0))),
            ],
            out_specs=pl.BlockSpec((b_tile, i_tile),
                                   lambda i, j, s: (i, jnp.maximum(j - ni, 0))),
            scratch_shapes=[pltpu.VMEM((b_tile, Hp), jnp.float32)],  # h accumulator
        ),
        compiler_params=pltpu.CompilerParams(
            dimension_semantics=("parallel", "arbitrary"),
            vmem_limit_bytes=vmem_limit),
    )(seed_arr, x_p, w_enc_t, b_enc, u_emb, w_dec_t, b_dec)

    return out_p[:B, :I]


# --------------------------------------------------------------------------- #
# Init + reference
# --------------------------------------------------------------------------- #
def init_cdae_params(key, num_users, num_items, hidden_dim):
    """Matches the module's init: xavier_normal_ weights; Linear biases keep
    torch's default uniform(-1/sqrt(fan_in), 1/sqrt(fan_in))."""
    k_enc, k_dec, k_emb, k_be, k_bd = jax.random.split(key, 5)

    def xavier_normal(k, shape):
        fan_out, fan_in = shape
        std = (2.0 / (fan_in + fan_out)) ** 0.5
        return std * jax.random.normal(k, shape, dtype=jnp.float32)

    w_enc = xavier_normal(k_enc, (hidden_dim, num_items))      # [H, I]
    w_dec = xavier_normal(k_dec, (num_items, hidden_dim))      # [I, H]
    emb = xavier_normal(k_emb, (num_users, hidden_dim))        # [U, H]
    b_enc = jax.random.uniform(k_be, (hidden_dim,), jnp.float32,
                               -1.0 / num_items ** 0.5, 1.0 / num_items ** 0.5)
    b_dec = jax.random.uniform(k_bd, (num_items,), jnp.float32,
                               -1.0 / hidden_dim ** 0.5, 1.0 / hidden_dim ** 0.5)
    return (w_enc, b_enc, emb, w_dec, b_dec)


def cdae_reference(user_idx, x, params):
    """Plain-JAX f32 reference (eval mode: dropout = identity)."""
    w_enc, b_enc, emb, w_dec, b_dec = params
    h = jnp.maximum(x @ w_enc.T + b_enc + emb[user_idx], 0.0)
    return h @ w_dec.T + b_dec


# --------------------------------------------------------------------------- #
# Demo / self-test
# --------------------------------------------------------------------------- #
if __name__ == "__main__":
    num_users, num_items, hidden_dim = 32, 512, 64
    batch = 8
    corruption_ratio = 0.5

    key = jax.random.PRNGKey(0)
    k_params, k_x, k_u = jax.random.split(key, 3)

    params = init_cdae_params(k_params, num_users, num_items, hidden_dim)
    prepared = prepare_cdae_params(params)          # one-time layout/bf16 prep

    # Implicit-feedback interaction matrix rows (0/1), as CDAE expects.
    x = (jax.random.uniform(k_x, (batch, num_items)) < 0.3).astype(jnp.float32)
    user_idx = jax.random.randint(k_u, (batch,), 0, num_users, dtype=jnp.int32)

    # Eval-mode forward (dropout identity, matching module.eval()).
    out = cdae_forward(user_idx, x, prepared,
                       corruption_ratio=corruption_ratio, training=False,
                       i_tile=128)
    out = jax.block_until_ready(out)

    ref = cdae_reference(user_idx, x, params)
    assert out.shape == (batch, num_items)
    err = float(jnp.max(jnp.abs(out - ref)))
    # bf16 weights + bf16 h on the MXU vs f32 reference -> ~1e-2 tolerance.
    assert jnp.allclose(out, ref, atol=5e-2, rtol=5e-2), f"max abs err {err}"

    print("KERNEL_OK")
</pallas_src>

<mosaic_0001>
module attributes {stable_mosaic.version = 11 : i64} {
  func.func @cdae_kernel(%arg0: i32, %arg1: i32, %arg2: memref<1xi32, #tpu.memory_space<smem>>, %arg3: memref<8x128xbf16, #tpu.memory_space<vmem>>, %arg4: memref<128x128xbf16, #tpu.memory_space<vmem>>, %arg5: memref<1x128xf32, #tpu.memory_space<vmem>>, %arg6: memref<8x128xf32, #tpu.memory_space<vmem>>, %arg7: memref<128x128xbf16, #tpu.memory_space<vmem>>, %arg8: memref<1x128xf32, #tpu.memory_space<vmem>>, %arg9: memref<8x128xf32, #tpu.memory_space<vmem>>, %arg10: memref<8x128xf32, #tpu.memory_space<vmem>>) attributes {dimension_semantics = [#tpu.dimension_semantics<parallel>, #tpu.dimension_semantics<arbitrary>], iteration_bounds = array<i64: 1, 8>, scalar_prefetch = 1 : i64, scratch_operands = 1 : i64, tpu.core_type = #tpu.core_type<tc>, window_params = [{transform_indices = @transform_0, window_bounds = array<i64: 8, 128>}, {transform_indices = @transform_1, window_bounds = array<i64: 128, 128>}, {pipeline_mode = #tpu.pipeline_mode<synchronous>, transform_indices = @transform_2, window_bounds = array<i64: 1, 128>}, {transform_indices = @transform_3, window_bounds = array<i64: 8, 128>}, {transform_indices = @transform_4, window_bounds = array<i64: 128, 128>}, {transform_indices = @transform_5, window_bounds = array<i64: 1, 128>}, {transform_indices = @transform_6, window_bounds = array<i64: 8, 128>}]} {
    %c0_i32 = arith.constant 0 : i32
    %0 = arith.cmpi eq, %arg1, %c0_i32 : i32
    %1 = arith.extui %0 : i1 to i32
    %c0_i32_0 = arith.constant 0 : i32
    %2 = arith.cmpi ne, %1, %c0_i32_0 : i32
    scf.if %2 {
      %cst = arith.constant 0.000000e+00 : f32
      %12 = vector.broadcast %cst : f32 to vector<8x128xf32>
      %c0 = arith.constant 0 : index
      %c0_5 = arith.constant 0 : index
      %13 = vector.load %arg10[%c0, %c0_5] : memref<8x128xf32, #tpu.memory_space<vmem>>, vector<8x128xf32>
      tpu.vector_store %arg10[%c0, %c0_5], %12 {strides = array<i32>} : memref<8x128xf32, #tpu.memory_space<vmem>>, vector<8x128xf32>,
    } else {
    }
    %c4_i32 = arith.constant 4 : i32
    %3 = arith.cmpi slt, %arg1, %c4_i32 : i32
    %4 = arith.extui %3 : i1 to i32
    %c0_i32_1 = arith.constant 0 : i32
    %5 = arith.cmpi ne, %4, %c0_i32_1 : i32
    scf.if %5 {
      %c0 = arith.constant 0 : index
      %c0_5 = arith.constant 0 : index
      %12 = vector.load %arg3[%c0, %c0_5] : memref<8x128xbf16, #tpu.memory_space<vmem>>, vector<8x128xbf16>
      %c0_6 = arith.constant 0 : index
      %c0_7 = arith.constant 0 : index
      %13 = vector.load %arg10[%c0_6, %c0_7] : memref<8x128xf32, #tpu.memory_space<vmem>>, vector<8x128xf32>
      %c0_8 = arith.constant 0 : index
      %c0_9 = arith.constant 0 : index
      %14 = vector.load %arg4[%c0_8, %c0_9] : memref<128x128xbf16, #tpu.memory_space<vmem>>, vector<128x128xbf16>
      %cst = arith.constant dense<0.000000e+00> : vector<8x128xf32>
      %15 = tpu.matmul %12, %14, %cst {dimension_numbers = #tpu.dot_dimension_numbers<[1], [0], [0], [1], [0, 0, 1, 1], [], []>} : vector<8x128xbf16>, vector<128x128xbf16>, vector<8x128xf32> -> vector<8x128xf32>
      %16 = arith.addf %13, %15 : vector<8x128xf32>
      %c0_10 = arith.constant 0 : index
      %c0_11 = arith.constant 0 : index
      %17 = vector.load %arg10[%c0_10, %c0_11] : memref<8x128xf32, #tpu.memory_space<vmem>>, vector<8x128xf32>
      tpu.vector_store %arg10[%c0_10, %c0_11], %16 {strides = array<i32>} : memref<8x128xf32, #tpu.memory_space<vmem>>, vector<8x128xf32>,
    } else {
    }
    %c3_i32 = arith.constant 3 : i32
    %6 = arith.cmpi eq, %arg1, %c3_i32 : i32
    %7 = arith.extui %6 : i1 to i32
    %c0_i32_2 = arith.constant 0 : i32
    %8 = arith.cmpi ne, %7, %c0_i32_2 : i32
    scf.if %8 {
      %c0 = arith.constant 0 : index
      %c0_5 = arith.constant 0 : index
      %12 = vector.load %arg10[%c0, %c0_5] : memref<8x128xf32, #tpu.memory_space<vmem>>, vector<8x128xf32>
      %c0_6 = arith.constant 0 : index
      %c0_7 = arith.constant 0 : index
      %13 = vector.load %arg5[%c0_6, %c0_7] : memref<1x128xf32, #tpu.memory_space<vmem>>, vector<1x128xf32>
      %14 = vector.broadcast %13 : vector<1x128xf32> to vector<8x128xf32>
      %15 = arith.addf %12, %14 : vector<8x128xf32>
      %c0_8 = arith.constant 0 : index
      %c0_9 = arith.constant 0 : index
      %16 = vector.load %arg6[%c0_8, %c0_9] : memref<8x128xf32, #tpu.memory_space<vmem>>, vector<8x128xf32>
      %17 = arith.addf %15, %16 : vector<8x128xf32>
      %cst = arith.constant 0.000000e+00 : f32
      %18 = vector.broadcast %cst : f32 to vector<8x128xf32>
      %19 = arith.maximumf %17, %18 : vector<8x128xf32>
      %c0_10 = arith.constant 0 : index
      %c0_11 = arith.constant 0 : index
      %20 = vector.load %arg10[%c0_10, %c0_11] : memref<8x128xf32, #tpu.memory_space<vmem>>, vector<8x128xf32>
      tpu.vector_store %arg10[%c0_10, %c0_11], %19 {strides = array<i32>} : memref<8x128xf32, #tpu.memory_space<vmem>>, vector<8x128xf32>,
    } else {
    }
    %c4_i32_3 = arith.constant 4 : i32
    %9 = arith.cmpi sge, %arg1, %c4_i32_3 : i32
    %10 = arith.extui %9 : i1 to i32
    %c0_i32_4 = arith.constant 0 : i32
    %11 = arith.cmpi ne, %10, %c0_i32_4 : i32
    scf.if %11 {
      %c0 = arith.constant 0 : index
      %c0_5 = arith.constant 0 : index
      %12 = vector.load %arg10[%c0, %c0_5] : memref<8x128xf32, #tpu.memory_space<vmem>>, vector<8x128xf32>
      %13 = arith.truncf %12 : vector<8x128xf32> to vector<8x128xbf16>
      %c0_6 = arith.constant 0 : index
      %c0_7 = arith.constant 0 : index
      %14 = vector.load %arg7[%c0_6, %c0_7] : memref<128x128xbf16, #tpu.memory_space<vmem>>, vector<128x128xbf16>
      %cst = arith.constant dense<0.000000e+00> : vector<8x128xf32>
      %15 = tpu.matmul %13, %14, %cst {dimension_numbers = #tpu.dot_dimension_numbers<[1], [0], [0], [1], [0, 0, 1, 1], [], []>} : vector<8x128xbf16>, vector<128x128xbf16>, vector<8x128xf32> -> vector<8x128xf32>
      %c0_8 = arith.constant 0 : index
      %c0_9 = arith.constant 0 : index
      %16 = vector.load %arg8[%c0_8, %c0_9] : memref<1x128xf32, #tpu.memory_space<vmem>>, vector<1x128xf32>
      %17 = vector.broadcast %16 : vector<1x128xf32> to vector<8x128xf32>
      %18 = arith.addf %15, %17 : vector<8x128xf32>
      %c0_10 = arith.constant 0 : index
      %c0_11 = arith.constant 0 : index
      %19 = vector.load %arg9[%c0_10, %c0_11] : memref<8x128xf32, #tpu.memory_space<vmem>>, vector<8x128xf32>
      tpu.vector_store %arg9[%c0_10, %c0_11], %18 {strides = array<i32>} : memref<8x128xf32, #tpu.memory_space<vmem>>, vector<8x128xf32>,
    } else {
    }
    return
  }
  func.func @transform_0(%arg0: i32, %arg1: i32, %arg2: memref<1xi32, #tpu.memory_space<smem>>) -> (i32, i32) {
    %c3_i32 = arith.constant 3 : i32
    %0 = arith.minsi %arg1, %c3_i32 : i32
    %c0_i32 = arith.constant 0 : i32
    return %arg0, %0 : i32, i32
  }
  func.func @transform_1(%arg0: i32, %arg1: i32, %arg2: memref<1xi32, #tpu.memory_space<smem>>) -> (i32, i32) {
    %c3_i32 = arith.constant 3 : i32
    %0 = arith.minsi %arg1, %c3_i32 : i32
    %c0_i32 = arith.constant 0 : i32
    %c0_i32_0 = arith.constant 0 : i32
    return %0, %c0_i32 : i32, i32
  }
  func.func @transform_2(%arg0: i32, %arg1: i32, %arg2: memref<1xi32, #tpu.memory_space<smem>>) -> (i32, i32) {
    %c0_i32 = arith.constant 0 : i32
    %c0_i32_0 = arith.constant 0 : i32
    %c0_i32_1 = arith.constant 0 : i32
    return %c0_i32, %c0_i32_0 : i32, i32
  }
  func.func @transform_3(%arg0: i32, %arg1: i32, %arg2: memref<1xi32, #tpu.memory_space<smem>>) -> (i32, i32) {
    %c0_i32 = arith.constant 0 : i32
    %c0_i32_0 = arith.constant 0 : i32
    return %arg0, %c0_i32 : i32, i32
  }
  func.func @transform_4(%arg0: i32, %arg1: i32, %arg2: memref<1xi32, #tpu.memory_space<smem>>) -> (i32, i32) {
    %c4_i32 = arith.constant 4 : i32
    %0 = arith.subi %arg1, %c4_i32 : i32
    %c0_i32 = arith.constant 0 : i32
    %1 = arith.maxsi %0, %c0_i32 : i32
    %c0_i32_0 = arith.constant 0 : i32
    %c0_i32_1 = arith.constant 0 : i32
    return %c0_i32_0, %1 : i32, i32
  }
  func.func @transform_5(%arg0: i32, %arg1: i32, %arg2: memref<1xi32, #tpu.memory_space<smem>>) -> (i32, i32) {
    %c4_i32 = arith.constant 4 : i32
    %0 = arith.subi %arg1, %c4_i32 : i32
    %c0_i32 = arith.constant 0 : i32
    %1 = arith.maxsi %0, %c0_i32 : i32
    %c0_i32_0 = arith.constant 0 : i32
    %c0_i32_1 = arith.constant 0 : i32
    return %c0_i32_0, %1 : i32, i32
  }
  func.func @transform_6(%arg0: i32, %arg1: i32, %arg2: memref<1xi32, #tpu.memory_space<smem>>) -> (i32, i32) {
    %c4_i32 = arith.constant 4 : i32
    %0 = arith.subi %arg1, %c4_i32 : i32
    %c0_i32 = arith.constant 0 : i32
    %1 = arith.maxsi %0, %c0_i32 : i32
    %c0_i32_0 = arith.constant 0 : i32
    return %arg0, %1 : i32, i32
  }
}

</mosaic_0001>

<llo_original>
// kernel: tpu_custom_call.1
$region0: #{tpu_custom_call.1}
  #allocation0 [shape = 'u32[]', space=smem, size = 0x4, offset = 0x4, fixed_abs, tag = 'smem constant byte address 0x4 - core index']
  #allocation1 [shape = 'u32[144,128]{1,0:T(1,128)}', space=vmem, size = 0x12000, scoped, tag = 'internal scratch']
  #allocation2 [shape = 'f32[8,128]{1,0:T(8,128)}', space=vmem, size = 0x1000, scoped, tag = 'scratch operand']
  #allocation3 [shape = 's32[1]{0}', space=sflag, size = 0x4, scoped, tag = 'scoped memory for tpu_custom_call.1']
  #allocation4 [shape = 's32[1]{0:T(128)S(6)}', space=smem, size = 0x200, scoped, tag = 'prefetched SMEM operand 0']
  %s0 = inlined_call_operand.<no memory space> [shape: s32[1], index: 0, kind: input, shape index: {}]
  %s1 = inlined_call_operand.hbm [shape: bf16[8,512], index: 1, kind: input, shape index: {}]
  %s2 = inlined_call_operand.hbm [shape: bf16[512,128], index: 2, kind: input, shape index: {}]
  %s3 = inlined_call_operand.vmem [shape: f32[1,128], index: 3, kind: input, shape index: {}]
  %s4 = inlined_call_operand.hbm [shape: f32[8,128], index: 4, kind: input, shape index: {}]
  %s5 = inlined_call_operand.hbm [shape: bf16[128,512], index: 5, kind: input, shape index: {}]
  %s6 = inlined_call_operand.vmem [shape: f32[1,512], index: 6, kind: input, shape index: {}]
  %s7 = inlined_call_operand.hbm [shape: f32[8,512], index: 7, kind: output, shape index: {}]
  %s8 = sld [smem:[#allocation0]]
  $region89: #{tpu_custom_call.1} parent=0
    _
  %s10 = ssub.s32 1, %s8
  %s11 = scalar_select 0, %s10, %s8
  %12 = sst [smem:[#allocation4]] %s0
  $region1: #{tpu_custom_call.1} parent=0
    #allocation5 [shape = 'u8[4096]{0}', space=vmem, size = 0x1000, scoped, tag = 'input window, operand 1']
    #allocation6 [shape = 's32[2]{0}', space=sflag, size = 0x8, scoped, tag = 'scoped memory for tpu_custom_call.1']
    #allocation7 [shape = 's32[2]{0}', space=sflag, size = 0x8, scoped, tag = 'scoped memory for tpu_custom_call.1']
    #allocation8 [shape = 'u8[65536]{0}', space=vmem, size = 0x10000, scoped, tag = 'input window, operand 2']
    #allocation9 [shape = 's32[2]{0}', space=sflag, size = 0x8, scoped, tag = 'scoped memory for tpu_custom_call.1']
    #allocation10 [shape = 'u8[4096]{0}', space=vmem, size = 0x1000, scoped, tag = 'input window, operand 4, single buffered']
    #allocation11 [shape = 'u8[65536]{0}', space=vmem, size = 0x10000, scoped, tag = 'input window, operand 5']
    #allocation12 [shape = 's32[2]{0}', space=sflag, size = 0x8, scoped, tag = 'scoped memory for tpu_custom_call.1']
    #allocation13 [shape = 'u8[8192]{0}', space=vmem, size = 0x2000, scoped, tag = 'output window, operand 0']
    %13 = vsyncpa [#allocation6], 0
    %s14 = scalar_lea.sflag [#allocation6], 1
    %15 = vsyncpa %s14, 0
    %16 = vsyncpa [#allocation9], 0
    %s17 = scalar_lea.sflag [#allocation9], 1
    %18 = vsyncpa %s17, 0
    %19 = vsyncpa [#allocation12], 0
    %s20 = scalar_lea.sflag [#allocation12], 1
    %21 = vsyncpa %s20, 0
    %22 = vsyncpa [#allocation7], 0
    %s23 = scalar_lea.sflag [#allocation7], 1
    %24 = vsyncpa %s23, 0
    loop: start=0, step=1, limit=10
    $region2: #{tpu_custom_call.1} parent=1 // loop_pre_header
      _
    $region3: #{tpu_custom_call.1} parent=1 // loop_header
      %s26 = sphi 0, %s30
      %p27 = scmp.ge.s32.totalorder %s26, 10
      %s33 = sphi 0, %s45
      %s34 = sphi 0, %s41
      %s35 = sphi 0, %s33
      %s36 = sphi 0, %s34
      %s37 = sphi 0, %s35
      %s38 = sphi 0, %s36
      %s54 = sphi 0, %s56
      %s57 = sphi 0, %s54
      %s58 = sphi 0, %s57
      %s74 = sphi 0, %s58
      %s84 = sphi 0, %s86
      %s87 = sphi 0, %s84
      %s88 = sphi 0, %s87
      %s104 = sphi 0, %s88
      %s108 = sphi 0, %s108
      %s110 = sphi 0, %s108
      %s111 = sphi 0, %s110
      %s125 = sphi 0, %s111
      %s131 = sphi 0, %s133
      %s134 = sphi 0, %s131
      %s135 = sphi 0, %s134
      %s151 = sphi 0, %s135
      %s163 = sphi 0, %s165
      %s166 = sphi 0, %s163
      %s167 = sphi 0, %s166
      %s183 = sphi 0, %s167
      %s195 = sphi 0, %s197
      %s198 = sphi 0, %s195
      %s199 = sphi 0, %s198
      %s215 = sphi 0, %s199
      %s229 = sphi 0, %s231
      %s232 = sphi 0, %s229
      %s233 = sphi 0, %s232
      %s249 = sphi 0, %s233
    $region4: #{tpu_custom_call.1} parent=1 // loop_header_branch
      %29 = sbr.rel (%p27) target = $region8
    $region5: #{tpu_custom_call.1} parent=1 // loop_body
      %s31 = ssub.s32 %s26, 1
      %s32 = ssub.s32 %s26, 2
      %s39 = sadd.s32 1, %s34
      %p40 = scmp.ge.s32.totalorder %s39, 8
      %s41 = scalar_select %p40, 0, %s39
      %s42 = sadd.s32 1, %s33
      %s43 = scalar_select %p40, %s42, %s33
      %p44 = scmp.ge.s32.totalorder %s43, 1
      %s45 = scalar_select %p44, 0, %s43
      %p46 = scmp.lt.s32.totalorder %s34, 3
      %s47 = scalar_select %p46, %s34, 3
      %p48 = scmp.lt.s32.totalorder %s41, 3
      %s49 = scalar_select %p48, %s41, 3
      %s50 = ssub.s32 %s33, %s45
      %s51 = ssub.s32 %s47, %s49
      %s52 = sor.u32 %s50, %s51
      %p53 = scmp.eq.s32.totalorder %s52, 0
      %s55 = sadd.s32 %s54, 1
      %s56 = scalar_select %p53, %s54, %s55
      %p59 = pneg %p53
      %p60 = scmp.eq.s32.totalorder %s26, 7
      %p61 = por %p59, %p60
      %p62 = scmp.ne.s32.totalorder %s54, %s57
      %p63 = scmp.eq.s32.totalorder %s26, 0
      %p64 = por %p62, %p63
      %p65 = scmp.ne.s32.totalorder %s54, %s57
      %p66 = scmp.eq.s32.totalorder %s31, 7
      %p67 = por %p65, %p66
      %p68 = scmp.ne.s32.totalorder %s57, %s58
      %p69 = scmp.eq.s32.totalorder %s31, 0
      %p70 = por %p68, %p69
      %p71 = scmp.ne.s32.totalorder %s57, %s58
      %p72 = scmp.eq.s32.totalorder %s32, 7
      %p73 = por %p71, %p72
      %p75 = scmp.ne.s32.totalorder %s58, %s74
      %p76 = scmp.eq.s32.totalorder %s32, 0
      %p77 = por %p75, %p76
      %p78 = scmp.lt.s32.totalorder %s34, 3
      %s79 = scalar_select %p78, %s34, 3
      %p80 = scmp.lt.s32.totalorder %s41, 3
      %s81 = scalar_select %p80, %s41, 3
      %s82 = ssub.s32 %s79, %s81
      %p83 = scmp.eq.s32.totalorder %s82, 0
      %s85 = sadd.s32 %s84, 1
      %s86 = scalar_select %p83, %s84, %s85
      %p89 = pneg %p83
      %p90 = scmp.eq.s32.totalorder %s26, 7
      %p91 = por %p89, %p90
      %p92 = scmp.ne.s32.totalorder %s84, %s87
      %p93 = scmp.eq.s32.totalorder %s26, 0
      %p94 = por %p92, %p93
      %p95 = scmp.ne.s32.totalorder %s84, %s87
      %p96 = scmp.eq.s32.totalorder %s31, 7
      %p97 = por %p95, %p96
      %p98 = scmp.ne.s32.totalorder %s87, %s88
      %p99 = scmp.eq.s32.totalorder %s31, 0
      %p100 = por %p98, %p99
      %p101 = scmp.ne.s32.totalorder %s87, %s88
      %p102 = scmp.eq.s32.totalorder %s32, 7
      %p103 = por %p101, %p102
      %p105 = scmp.ne.s32.totalorder %s88, %s104
      %p106 = scmp.eq.s32.totalorder %s32, 0
      %p107 = por %p105, %p106
      %s109 = sadd.s32 %s108, 1
      %p112 = scmp.eq.s32.totalorder %s26, 7
      %p113 = scmp.ne.s32.totalorder %s108, %s110
      %p114 = scmp.eq.s32.totalorder %s26, 0
      %p115 = por %p113, %p114
      %p116 = scmp.ne.s32.totalorder %s108, %s110
      %p117 = scmp.eq.s32.totalorder %s31, 7
      %p118 = por %p116, %p117
      %p119 = scmp.ne.s32.totalorder %s110, %s111
      %p120 = scmp.eq.s32.totalorder %s31, 0
      %p121 = por %p119, %p120
      %p122 = scmp.ne.s32.totalorder %s110, %s111
      %p123 = scmp.eq.s32.totalorder %s32, 7
      %p124 = por %p122, %p123
      %p126 = scmp.ne.s32.totalorder %s111, %s125
      %p127 = scmp.eq.s32.totalorder %s32, 0
      %p128 = por %p126, %p127
      %s129 = ssub.s32 %s33, %s45
      %p130 = scmp.eq.s32.totalorder %s129, 0
      %s132 = sadd.s32 %s131, 1
      %s133 = scalar_select %p130, %s131, %s132
      %p136 = pneg %p130
      %p137 = scmp.eq.s32.totalorder %s26, 7
      %p138 = por %p136, %p137
      %p139 = scmp.ne.s32.totalorder %s131, %s134
      %p140 = scmp.eq.s32.totalorder %s26, 0
      %p141 = por %p139, %p140
      %p142 = scmp.ne.s32.totalorder %s131, %s134
      %p143 = scmp.eq.s32.totalorder %s31, 7
      %p144 = por %p142, %p143
      %p145 = scmp.ne.s32.totalorder %s134, %s135
      %p146 = scmp.eq.s32.totalorder %s31, 0
      %p147 = por %p145, %p146
      %p148 = scmp.ne.s32.totalorder %s134, %s135
      %p149 = scmp.eq.s32.totalorder %s32, 7
      %p150 = por %p148, %p149
      %p152 = scmp.ne.s32.totalorder %s135, %s151
      %p153 = scmp.eq.s32.totalorder %s32, 0
      %p154 = por %p152, %p153
      %s155 = ssub.s32 %s34, 4
      %p156 = scmp.gt.s32.totalorder %s155, 0
      %s157 = scalar_select %p156, %s155, 0
      %s158 = ssub.s32 %s41, 4
      %p159 = scmp.gt.s32.totalorder %s158, 0
      %s160 = scalar_select %p159, %s158, 0
      %s161 = ssub.s32 %s157, %s160
      %p162 = scmp.eq.s32.totalorder %s161, 0
      %s164 = sadd.s32 %s163, 1
      %s165 = scalar_select %p162, %s163, %s164
      %p168 = pneg %p162
      %p169 = scmp.eq.s32.totalorder %s26, 7
      %p170 = por %p168, %p169
      %p171 = scmp.ne.s32.totalorder %s163, %s166
      %p172 = scmp.eq.s32.totalorder %s26, 0
      %p173 = por %p171, %p172
      %p174 = scmp.ne.s32.totalorder %s163, %s166
      %p175 = scmp.eq.s32.totalorder %s31, 7
      %p176 = por %p174, %p175
      %p177 = scmp.ne.s32.totalorder %s166, %s167
      %p178 = scmp.eq.s32.totalorder %s31, 0
      %p179 = por %p177, %p178
      %p180 = scmp.ne.s32.totalorder %s166, %s167
      %p181 = scmp.eq.s32.totalorder %s32, 7
      %p182 = por %p180, %p181
      %p184 = scmp.ne.s32.totalorder %s167, %s183
      %p185 = scmp.eq.s32.totalorder %s32, 0
      %p186 = por %p184, %p185
      %s187 = ssub.s32 %s34, 4
      %p188 = scmp.gt.s32.totalorder %s187, 0
      %s189 = scalar_select %p188, %s187, 0
      %s190 = ssub.s32 %s41, 4
      %p191 = scmp.gt.s32.totalorder %s190, 0
      %s192 = scalar_select %p191, %s190, 0
      %s193 = ssub.s32 %s189, %s192
      %p194 = scmp.eq.s32.totalorder %s193, 0
      %s196 = sadd.s32 %s195, 1
      %s197 = scalar_select %p194, %s195, %s196
      %p200 = pneg %p194
      %p201 = scmp.eq.s32.totalorder %s26, 7
      %p202 = por %p200, %p201
      %p203 = scmp.ne.s32.totalorder %s195, %s198
      %p204 = scmp.eq.s32.totalorder %s26, 0
      %p205 = por %p203, %p204
      %p206 = scmp.ne.s32.totalorder %s195, %s198
      %p207 = scmp.eq.s32.totalorder %s31, 7
      %p208 = por %p206, %p207
      %p209 = scmp.ne.s32.totalorder %s198, %s199
      %p210 = scmp.eq.s32.totalorder %s31, 0
      %p211 = por %p209, %p210
      %p212 = scmp.ne.s32.totalorder %s198, %s199
      %p213 = scmp.eq.s32.totalorder %s32, 7
      %p214 = por %p212, %p213
      %p216 = scmp.ne.s32.totalorder %s199, %s215
      %p217 = scmp.eq.s32.totalorder %s32, 0
      %p218 = por %p216, %p217
      %s219 = ssub.s32 %s34, 4
      %p220 = scmp.gt.s32.totalorder %s219, 0
      %s221 = scalar_select %p220, %s219, 0
      %s222 = ssub.s32 %s41, 4
      %p223 = scmp.gt.s32.totalorder %s222, 0
      %s224 = scalar_select %p223, %s222, 0
      %s225 = ssub.s32 %s33, %s45
      %s226 = ssub.s32 %s221, %s224
      %s227 = sor.u32 %s225, %s226
      %p228 = scmp.eq.s32.totalorder %s227, 0
      %s230 = sadd.s32 %s229, 1
      %s231 = scalar_select %p228, %s229, %s230
      %p234 = pneg %p228
      %p235 = scmp.eq.s32.totalorder %s26, 7
      %p236 = por %p234, %p235
      %p237 = scmp.ne.s32.totalorder %s229, %s232
      %p238 = scmp.eq.s32.totalorder %s26, 0
      %p239 = por %p237, %p238
      %p240 = scmp.ne.s32.totalorder %s229, %s232
      %p241 = scmp.eq.s32.totalorder %s31, 7
      %p242 = por %p240, %p241
      %p243 = scmp.ne.s32.totalorder %s232, %s233
      %p244 = scmp.eq.s32.totalorder %s31, 0
      %p245 = por %p243, %p244
      %p246 = scmp.ne.s32.totalorder %s232, %s233
      %p247 = scmp.eq.s32.totalorder %s32, 7
      %p248 = por %p246, %p247
      %p250 = scmp.ne.s32.totalorder %s233, %s249
      %p251 = scmp.eq.s32.totalorder %s32, 0
      %p252 = por %p250, %p251
      %p253 = scmp.le.s32.totalorder 1, %s26
      %p254 = scmp.lt.s32.totalorder %s26, 9
      %p255 = pnand %p253, %p254
      %p256 = pneg %p255
      // Predicated region
      $region9: #{tpu_custom_call.1} parent=5 // pred_check
        _
      $region10: #{tpu_custom_call.1} parent=5 // pred_check_branch
        %258 = sbr.rel (%p255) target = $region12
      $region11: #{tpu_custom_call.1} parent=5 // pred_region
        %s259 = ssub.s32 %s26, 1
        // Predicated region
        $region13: #{tpu_custom_call.1} parent=11 // pred_check
          %p260 = pneg %p121
        $region14: #{tpu_custom_call.1} parent=11 // pred_check_branch
          %262 = sbr.rel (%p260) target = $region16
        $region15: #{tpu_custom_call.1} parent=11 // pred_region
          _
        $region16: #{tpu_custom_call.1} parent=11 // pred_fallthru
          _
        // Predicated region
        $region17: #{tpu_custom_call.1} parent=11 // pred_check
          %p263 = pneg %p147
        $region18: #{tpu_custom_call.1} parent=11 // pred_check_branch
          %265 = sbr.rel (%p263) target = $region20
        $region19: #{tpu_custom_call.1} parent=11 // pred_region
          %s267 = ssub.s32 128, 128
          %268 = vsyncadd [#allocation9], %s267
          %s269 = smul.addr %s35, 128
          %s270 = scalar_lea.hbm %s4, %s269
          %s272 = sshll.u32 [#allocation10], 4
          %s273 = int_to_ptr.vmem [resolvable:$true] %s272
          %275 = dma.hbm_to_vmem [thread:$0]  %s270, 128, %s273, [#allocation9]
        $region20: #{tpu_custom_call.1} parent=11 // pred_fallthru
          _
      $region12: #{tpu_custom_call.1} parent=5 // pred_fallthru
        _
      %p276 = scmp.lt.s32.totalorder %s26, 8
      // Predicated region
      $region21: #{tpu_custom_call.1} parent=5 // pred_check
        %p277 = pneg %p276
      $region22: #{tpu_custom_call.1} parent=5 // pred_check_branch
        %279 = sbr.rel (%p277) target = $region24
      $region23: #{tpu_custom_call.1} parent=5 // pred_region
        // Predicated region
        $region25: #{tpu_custom_call.1} parent=23 // pred_check
          %p280 = pneg %p64
        $region26: #{tpu_custom_call.1} parent=23 // pred_check_branch
          %282 = sbr.rel (%p280) target = $region28
        $region27: #{tpu_custom_call.1} parent=23 // pred_region
          %s283 = sand.u32 %s54, 1
          %s284 = scalar_lea.sflag [#allocation6], %s283
          %s285 = sand.u32 %s54, 1
          %s286 = smul.addr %s285, 4
          %s287 = scalar_lea.vmem [#allocation5], %s286
          %p288 = scmp.lt.s32.totalorder %s34, 3
          %s289 = scalar_select %p288, %s34, 3
          %s291 = ssub.s32 64, 64
          %292 = vsyncadd %s284, %s291
          %s293 = smul.addr %s33, 4
          %s294 = sadd.s32 %s289, %s293
          %s295 = smul.addr %s294, 64
          %s296 = scalar_lea.hbm %s1, %s295
          %s298 = sshll.u32 %s287, 4
          %s299 = int_to_ptr.vmem [resolvable:$true] %s298
          %301 = dma.hbm_to_vmem [thread:$0]  %s296, 64, %s299, %s284
        $region28: #{tpu_custom_call.1} parent=23 // pred_fallthru
          _
        // Predicated region
        $region29: #{tpu_custom_call.1} parent=23 // pred_check
          %p302 = pneg %p94
        $region30: #{tpu_custom_call.1} parent=23 // pred_check_branch
          %304 = sbr.rel (%p302) target = $region32
        $region31: #{tpu_custom_call.1} parent=23 // pred_region
          %s305 = sand.u32 %s26, 1
          %s306 = scalar_lea.sflag [#allocation9], %s305
          %s307 = sand.u32 %s84, 1
          %s308 = smul.addr %s307, 64
          %s309 = scalar_lea.vmem [#allocation8], %s308
          %p310 = scmp.lt.s32.totalorder %s34, 3
          %s311 = scalar_select %p310, %s34, 3
          %s312 = smul.u32 16, %s311
          %s314 = ssub.s32 1024, 1024
          %315 = vsyncadd %s306, %s314
          %s316 = smul.addr %s312, 64
          %s317 = scalar_lea.hbm %s2, %s316
          %s318 = sshll.u32 %s309, 4
          %s319 = int_to_ptr.vmem [resolvable:$true] %s318
          %324 = dma.hbm_to_vmem [thread:$0]  %s317, 1024, %s319, %s306, 64, 64, 4
        $region32: #{tpu_custom_call.1} parent=23 // pred_fallthru
          _
        // Predicated region
        $region33: #{tpu_custom_call.1} parent=23 // pred_check
          %p325 = pneg %p173
        $region34: #{tpu_custom_call.1} parent=23 // pred_check_branch
          %327 = sbr.rel (%p325) target = $region36
        $region35: #{tpu_custom_call.1} parent=23 // pred_region
          %s328 = sand.u32 %s163, 1
          %s329 = scalar_lea.sflag [#allocation12], %s328
          %s330 = sand.u32 %s163, 1
          %s331 = smul.addr %s330, 64
          %s332 = scalar_lea.vmem [#allocation11], %s331
          %s333 = ssub.s32 %s34, 4
          %p334 = scmp.gt.s32.totalorder %s333, 0
          %s335 = scalar_select %p334, %s333, 0
          %s337 = ssub.s32 1024, 1024
          %338 = vsyncadd %s329, %s337
          %s339 = smul.addr %s335, 64
          %s340 = scalar_lea.hbm %s5, %s339
          %s341 = sshll.u32 %s332, 4
          %s342 = int_to_ptr.vmem [resolvable:$true] %s341
          %347 = dma.hbm_to_vmem [thread:$0]  %s340, 1024, %s342, %s329, 256, 64, 4
        $region36: #{tpu_custom_call.1} parent=23 // pred_fallthru
          _
        // Predicated region
        $region37: #{tpu_custom_call.1} parent=23 // pred_check
          %p348 = pneg %p205
        $region38: #{tpu_custom_call.1} parent=23 // pred_check_branch
          %350 = sbr.rel (%p348) target = $region40
        $region39: #{tpu_custom_call.1} parent=23 // pred_region
          %s351 = ssub.s32 %s34, 4
          %p352 = scmp.gt.s32.totalorder %s351, 0
          %s353 = scalar_select %p352, %s351, 0
          %p354 = scmp.lt.s32.totalorder %s353, 3
          %s355 = scalar_select %p354, %s353, 3
          %s356 = scalar_lea.vmem %s6, %s355
          %s357 = ssub.s32 %s34, 4
          %p358 = scmp.gt.s32.totalorder %s357, 0
          %s359 = scalar_select %p358, %s357, 0
        $region40: #{tpu_custom_call.1} parent=23 // pred_fallthru
          _
      $region24: #{tpu_custom_call.1} parent=5 // pred_fallthru
        _
      %p360 = scmp.le.s32.totalorder 1, %s26
      %p361 = scmp.lt.s32.totalorder %s26, 9
      %p362 = pnand %p360, %p361
      %p363 = pneg %p362
      // Predicated region
      $region41: #{tpu_custom_call.1} parent=5 // pred_check
        _
      $region42: #{tpu_custom_call.1} parent=5 // pred_check_branch
        %365 = sbr.rel (%p362) target = $region44
      $region43: #{tpu_custom_call.1} parent=5 // pred_region
        %s366 = ssub.s32 %s26, 1
        %s367 = sand.u32 %s57, 1
        %s368 = scalar_lea.sflag [#allocation6], %s367
        %s369 = sand.u32 %s57, 1
        %s370 = smul.addr %s369, 4
        %s371 = scalar_lea.vmem [#allocation5], %s370
        // Predicated region
        $region45: #{tpu_custom_call.1} parent=43 // pred_check
          %p372 = pneg %p70
        $region46: #{tpu_custom_call.1} parent=43 // pred_check_branch
          %374 = sbr.rel (%p372) target = $region48
        $region47: #{tpu_custom_call.1} parent=43 // pred_region
          %375 = dma.done %s368, 64
        $region48: #{tpu_custom_call.1} parent=43 // pred_fallthru
          _
        %s376 = sand.u32 %s31, 1
        %s377 = scalar_lea.sflag [#allocation9], %s376
        %s378 = sand.u32 %s87, 1
        %s379 = smul.addr %s378, 64
        %s380 = scalar_lea.vmem [#allocation8], %s379
        // Predicated region
        $region49: #{tpu_custom_call.1} parent=43 // pred_check
          %p381 = pneg %p100
        $region50: #{tpu_custom_call.1} parent=43 // pred_check_branch
          %383 = sbr.rel (%p381) target = $region52
        $region51: #{tpu_custom_call.1} parent=43 // pred_region
          %384 = dma.done %s377, 1024
        $region52: #{tpu_custom_call.1} parent=43 // pred_fallthru
          _
        // Predicated region
        $region53: #{tpu_custom_call.1} parent=43 // pred_check
          %p385 = pneg %p147
        $region54: #{tpu_custom_call.1} parent=43 // pred_check_branch
          %387 = sbr.rel (%p385) target = $region56
        $region55: #{tpu_custom_call.1} parent=43 // pred_region
          %388 = dma.done [#allocation9], 128
        $region56: #{tpu_custom_call.1} parent=43 // pred_fallthru
          _
        %s389 = sand.u32 %s166, 1
        %s390 = scalar_lea.sflag [#allocation12], %s389
        %s391 = sand.u32 %s166, 1
        %s392 = smul.addr %s391, 64
        %s393 = scalar_lea.vmem [#allocation11], %s392
        // Predicated region
        $region57: #{tpu_custom_call.1} parent=43 // pred_check
          %p394 = pneg %p179
        $region58: #{tpu_custom_call.1} parent=43 // pred_check_branch
          %396 = sbr.rel (%p394) target = $region60
        $region59: #{tpu_custom_call.1} parent=43 // pred_region
          %397 = dma.done %s390, 1024
        $region60: #{tpu_custom_call.1} parent=43 // pred_fallthru
          _
        %s398 = sand.u32 %s57, 1
        %s399 = scalar_lea.sflag [#allocation6], %s398
        %s400 = sand.u32 %s57, 1
        %s401 = smul.addr %s400, 4
        %s402 = scalar_lea.vmem [#allocation5], %s401
        %p403 = pneg %p70
        %p404 = pneg %p67
        %s405 = sand.u32 %s31, 1
        %s406 = scalar_lea.sflag [#allocation9], %s405
        %s407 = sand.u32 %s87, 1
        %s408 = smul.addr %s407, 64
        %s409 = scalar_lea.vmem [#allocation8], %s408
        %p410 = pneg %p100
        %p411 = pneg %p97
        %p412 = pneg %p121
        %p413 = pneg %p118
        %p414 = pneg %p147
        %p415 = pneg %p144
        %s416 = sand.u32 %s166, 1
        %s417 = scalar_lea.sflag [#allocation12], %s416
        %s418 = sand.u32 %s166, 1
        %s419 = smul.addr %s418, 64
        %s420 = scalar_lea.vmem [#allocation11], %s419
        %p421 = pneg %p179
        %p422 = pneg %p176
        %s423 = ssub.s32 %s36, 4
        %p424 = scmp.gt.s32.totalorder %s423, 0
        %s425 = scalar_select %p424, %s423, 0
        %p426 = scmp.lt.s32.totalorder %s425, 3
        %s427 = scalar_select %p426, %s425, 3
        %s428 = scalar_lea.vmem %s6, %s427
        %p429 = pneg %p211
        %p430 = pneg %p208
        %p431 = pneg %p245
        %p432 = pneg %p242
        %s433 = sand.u32 %s232, 1
        %s434 = scalar_lea.sflag [#allocation7], %s433
        %s435 = sand.u32 %s232, 1
        %s436 = smul.addr %s435, 8
        %s437 = scalar_lea.vmem [#allocation13], %s436
        %p438 = scmp.lt.s32.totalorder %s36, 3
        %s439 = scalar_select %p438, %s36, 3
        %p440 = scmp.lt.s32.totalorder %s36, 3
        %s441 = scalar_select %p440, %s36, 3
        %s442 = smul.u32 16, %s441
        %s443 = ssub.s32 %s36, 4
        %p444 = scmp.gt.s32.totalorder %s443, 0
        %s445 = scalar_select %p444, %s443, 0
        %s446 = ssub.s32 %s36, 4
        %p447 = scmp.gt.s32.totalorder %s446, 0
        %s448 = scalar_select %p447, %s446, 0
        %p449 = scmp.lt.s32.totalorder %s448, 3
        %s450 = scalar_select %p449, %s448, 3
        %s451 = scalar_lea.vmem %s6, %s450
        %s452 = ssub.s32 %s36, 4
        %p453 = scmp.gt.s32.totalorder %s452, 0
        %s454 = scalar_select %p453, %s452, 0
        %s455 = ssub.s32 %s36, 4
        %p456 = scmp.gt.s32.totalorder %s455, 0
        %s457 = scalar_select %p456, %s455, 0
        %p459 = scmp.eq.s32.totalorder %s36, 0
        // Predicated region
        $region61: #{tpu_custom_call.1} parent=43 // pred_check
          %p460 = pneg %p459
        $region62: #{tpu_custom_call.1} parent=43 // pred_check_branch
          %462 = sbr.rel (%p460) target = $region64
        $region63: #{tpu_custom_call.1} parent=43 // pred_region
          %463 = vst [vmem:[#allocation2] sm:$0xff] 0.0
        $region64: #{tpu_custom_call.1} parent=43 // pred_fallthru
          _
        %p464 = scmp.lt.s32.totalorder %s36, 4
        // Predicated region
        $region65: #{tpu_custom_call.1} parent=43 // pred_check
          %p465 = pneg %p464
        $region66: #{tpu_custom_call.1} parent=43 // pred_check_branch
          %467 = sbr.rel (%p465) target = $region68
        $region67: #{tpu_custom_call.1} parent=43 // pred_region
          %v468 = vld [vmem:[%s371] sm:$0xf]
          %v469 = vld [vmem:[#allocation2] sm:$0xff]
          %v470 = vld [vmem:[%s380] sm:$0xf]
          %v471 = vld [vmem:[%s380 + $0x4] sm:$0xf]
          %v472 = vld [vmem:[%s380 + $0x8] sm:$0xf]
          %v473 = vld [vmem:[%s380 + $0xc] sm:$0xf]
          %v474 = vld [vmem:[%s380 + $0x10] sm:$0xf]
          %v475 = vld [vmem:[%s380 + $0x14] sm:$0xf]
          %v476 = vld [vmem:[%s380 + $0x18] sm:$0xf]
          %v477 = vld [vmem:[%s380 + $0x1c] sm:$0xf]
          %v478 = vld [vmem:[%s380 + $0x20] sm:$0xf]
          %v479 = vld [vmem:[%s380 + $0x24] sm:$0xf]
          %v480 = vld [vmem:[%s380 + $0x28] sm:$0xf]
          %v481 = vld [vmem:[%s380 + $0x2c] sm:$0xf]
          %v482 = vld [vmem:[%s380 + $0x30] sm:$0xf]
          %v483 = vld [vmem:[%s380 + $0x34] sm:$0xf]
          %v484 = vld [vmem:[%s380 + $0x38] sm:$0xf]
          %v485 = vld [vmem:[%s380 + $0x3c] sm:$0xf]
          %v502 = vunpack.c.l.b16 %v470
          %v503 = vunpack.c.l.b16 %v471
          %v504 = vunpack.c.l.b16 %v472
          %v505 = vunpack.c.l.b16 %v473
          %v506 = vunpack.c.l.b16 %v474
          %v507 = vunpack.c.l.b16 %v475
          %v508 = vunpack.c.l.b16 %v476
          %v509 = vunpack.c.l.b16 %v477
          %v510 = vunpack.c.l.b16 %v478
          %v511 = vunpack.c.l.b16 %v479
          %v512 = vunpack.c.l.b16 %v480
          %v513 = vunpack.c.l.b16 %v481
          %v514 = vunpack.c.l.b16 %v482
          %v515 = vunpack.c.l.b16 %v483
          %v516 = vunpack.c.l.b16 %v484
          %v517 = vunpack.c.l.b16 %v485
          %v518 = vpack.c.b16 %v503, %v502
          %v519 = vpack.c.b16 %v505, %v504
          %v520 = vpack.c.b16 %v507, %v506
          %v521 = vpack.c.b16 %v509, %v508
          %v522 = vpack.c.b16 %v511, %v510
          %v523 = vpack.c.b16 %v513, %v512
          %v524 = vpack.c.b16 %v515, %v514
          %v525 = vpack.c.b16 %v517, %v516
          %534 = vmatprep.subr.bf16.mxu0 0
          %535 = vmatpush1.bf16.msra.mxu0 %v525
          %536 = vmatprep.subr.bf16.mxu0 0
          %537 = vmatpush1.bf16.msra.mxu0 %v524
          %538 = vmatprep.subr.bf16.mxu0 0
          %539 = vmatpush1.bf16.msra.mxu0 %v523
          %540 = vmatprep.subr.bf16.mxu0 0
          %541 = vmatpush1.bf16.msra.mxu0 %v522
          %542 = vmatprep.subr.bf16.mxu0 0
          %543 = vmatpush1.bf16.msra.mxu0 %v521
          %544 = vmatprep.subr.bf16.mxu0 0
          %545 = vmatpush1.bf16.msra.mxu0 %v520
          %546 = vmatprep.subr.bf16.mxu0 0
          %547 = vmatpush1.bf16.msra.mxu0 %v519
          %548 = vmatprep.subr.bf16.mxu0 0
          %549 = vmatpush1.bf16.msra.mxu0 %v518
          %550 = vmatprep.subr.bf16.mxu0 0
          %551 = vmatpush2.bf16.msra.mxu0 0
          %552 = vmatprep.subr.bf16.mxu0 0
          %553 = vmatpush2.bf16.msra.mxu0 0
          %554 = vmatprep.subr.bf16.mxu0 0
          %555 = vmatpush2.bf16.msra.mxu0 0
          %556 = vmatprep.subr.bf16.mxu0 0
          %557 = vmatpush2.bf16.msra.mxu0 0
          %558 = vmatprep.subr.bf16.mxu0 0
          %559 = vmatpush2.bf16.msra.mxu0 0
          %560 = vmatprep.subr.bf16.mxu0 0
          %561 = vmatpush2.bf16.msra.mxu0 0
          %562 = vmatprep.subr.bf16.mxu0 0
          %563 = vmatpush2.bf16.msra.mxu0 0
          %564 = vmatprep.subr.bf16.mxu0 0
          %565 = vmatpush2.bf16.msra.mxu0 0
          %566 = vmatprep.mubr.bf16.mxu0 0
          %567 = vmatmul.mubr.bf16.gmra.mxu0 %v468
          %v568 = vpop.f32.mrf.mxu0
          %v569 = vadd.f32 0.0, %v568
          %v570 = vpop.f32.mrf.mxu0
          %v571 = vpop.f32.mrf.mxu0
          %v572 = vpop.f32.mrf.mxu0
          %573 = vdwg.mxu0
          %v574 = vadd.f32 %v469, %v569
          %575 = vst [vmem:[#allocation2] sm:$0xff] %v574
        $region68: #{tpu_custom_call.1} parent=43 // pred_fallthru
          _
        %p576 = scmp.eq.s32.totalorder %s36, 3
        // Predicated region
        $region69: #{tpu_custom_call.1} parent=43 // pred_check
          %p577 = pneg %p576
        $region70: #{tpu_custom_call.1} parent=43 // pred_check_branch
          %579 = sbr.rel (%p577) target = $region72
        $region71: #{tpu_custom_call.1} parent=43 // pred_region
          %v580 = vld [vmem:[#allocation2] sm:$0xff]
          %v581 = vld [vmem:[%s3] sm:$0x1]
          %v583 = vlaneseq
          %v584 = vshrl.u32 %v583, 7
          %v585 = vsub.s32 0, %v584
          %v586 = vrot.slane %v581, %v585
          %v588 = vadd.f32 %v580, %v586
          %v589 = vld [vmem:[#allocation10] sm:$0xff]
          %v590 = vadd.f32 %v588, %v589
          %v591 = vmax.f32 %v590, 0.0
          %592 = vst [vmem:[#allocation2] sm:$0xff] %v591
        $region72: #{tpu_custom_call.1} parent=43 // pred_fallthru
          _
        %p593 = scmp.ge.s32.totalorder %s36, 4
        // Predicated region
        $region73: #{tpu_custom_call.1} parent=43 // pred_check
          %p594 = pneg %p593
        $region74: #{tpu_custom_call.1} parent=43 // pred_check_branch
          %596 = sbr.rel (%p594) target = $region76
        $region75: #{tpu_custom_call.1} parent=43 // pred_region
          %v597 = vld [vmem:[#allocation2] sm:$0xff]
          %v598 = vpack.c.bf16 %v597, %v597
          %v599 = vld [vmem:[%s393] sm:$0xf]
          %v600 = vld [vmem:[%s393 + $0x4] sm:$0xf]
          %v601 = vld [vmem:[%s393 + $0x8] sm:$0xf]
          %v602 = vld [vmem:[%s393 + $0xc] sm:$0xf]
          %v603 = vld [vmem:[%s393 + $0x10] sm:$0xf]
          %v604 = vld [vmem:[%s393 + $0x14] sm:$0xf]
          %v605 = vld [vmem:[%s393 + $0x18] sm:$0xf]
          %v606 = vld [vmem:[%s393 + $0x1c] sm:$0xf]
          %v607 = vld [vmem:[%s393 + $0x20] sm:$0xf]
          %v608 = vld [vmem:[%s393 + $0x24] sm:$0xf]
          %v609 = vld [vmem:[%s393 + $0x28] sm:$0xf]
          %v610 = vld [vmem:[%s393 + $0x2c] sm:$0xf]
          %v611 = vld [vmem:[%s393 + $0x30] sm:$0xf]
          %v612 = vld [vmem:[%s393 + $0x34] sm:$0xf]
          %v613 = vld [vmem:[%s393 + $0x38] sm:$0xf]
          %v614 = vld [vmem:[%s393 + $0x3c] sm:$0xf]
          %v615 = vld [vmem:[%s451] sm:$0x1]
          %v617 = vlaneseq
          %v618 = vshrl.u32 %v617, 7
          %v619 = vsub.s32 0, %v618
          %v620 = vrot.slane %v615, %v619
          %v638 = vunpack.c.l.b16 %v599
          %v639 = vunpack.c.l.b16 %v600
          %v640 = vunpack.c.l.b16 %v601
          %v641 = vunpack.c.l.b16 %v602
          %v642 = vunpack.c.l.b16 %v603
          %v643 = vunpack.c.l.b16 %v604
          %v644 = vunpack.c.l.b16 %v605
          %v645 = vunpack.c.l.b16 %v606
          %v646 = vunpack.c.l.b16 %v607
          %v647 = vunpack.c.l.b16 %v608
          %v648 = vunpack.c.l.b16 %v609
          %v649 = vunpack.c.l.b16 %v610
          %v650 = vunpack.c.l.b16 %v611
          %v651 = vunpack.c.l.b16 %v612
          %v652 = vunpack.c.l.b16 %v613
          %v653 = vunpack.c.l.b16 %v614
          %v654 = vpack.c.b16 %v639, %v638
          %v655 = vpack.c.b16 %v641, %v640
          %v656 = vpack.c.b16 %v643, %v642
          %v657 = vpack.c.b16 %v645, %v644
          %v658 = vpack.c.b16 %v647, %v646
          %v659 = vpack.c.b16 %v649, %v648
          %v660 = vpack.c.b16 %v651, %v650
          %v661 = vpack.c.b16 %v653, %v652
          %670 = vmatprep.subr.bf16.mxu0 0
          %671 = vmatpush1.bf16.msra.mxu0 %v661
          %672 = vmatprep.subr.bf16.mxu0 0
          %673 = vmatpush1.bf16.msra.mxu0 %v660
          %674 = vmatprep.subr.bf16.mxu0 0
          %675 = vmatpush1.bf16.msra.mxu0 %v659
          %676 = vmatprep.subr.bf16.mxu0 0
          %677 = vmatpush1.bf16.msra.mxu0 %v658
          %678 = vmatprep.subr.bf16.mxu0 0
          %679 = vmatpush1.bf16.msra.mxu0 %v657
          %680 = vmatprep.subr.bf16.mxu0 0
          %681 = vmatpush1.bf16.msra.mxu0 %v656
          %682 = vmatprep.subr.bf16.mxu0 0
          %683 = vmatpush1.bf16.msra.mxu0 %v655
          %684 = vmatprep.subr.bf16.mxu0 0
          %685 = vmatpush1.bf16.msra.mxu0 %v654
          %686 = vmatprep.subr.bf16.mxu0 0
          %687 = vmatpush2.bf16.msra.mxu0 0
          %688 = vmatprep.subr.bf16.mxu0 0
          %689 = vmatpush2.bf16.msra.mxu0 0
          %690 = vmatprep.subr.bf16.mxu0 0
          %691 = vmatpush2.bf16.msra.mxu0 0
          %692 = vmatprep.subr.bf16.mxu0 0
          %693 = vmatpush2.bf16.msra.mxu0 0
          %694 = vmatprep.subr.bf16.mxu0 0
          %695 = vmatpush2.bf16.msra.mxu0 0
          %696 = vmatprep.subr.bf16.mxu0 0
          %697 = vmatpush2.bf16.msra.mxu0 0
          %698 = vmatprep.subr.bf16.mxu0 0
          %699 = vmatpush2.bf16.msra.mxu0 0
          %700 = vmatprep.subr.bf16.mxu0 0
          %701 = vmatpush2.bf16.msra.mxu0 0
          %702 = vmatprep.mubr.bf16.mxu0 0
          %703 = vmatmul.mubr.bf16.gmra.mxu0 %v598
          %v704 = vpop.f32.mrf.mxu0
          %v705 = vadd.f32 %v620, %v704
          %v706 = vpop.f32.mrf.mxu0
          %v707 = vpop.f32.mrf.mxu0
          %v708 = vpop.f32.mrf.mxu0
          %709 = vdwg.mxu0
          %710 = vst [vmem:[%s437] sm:$0xff] %v705
        $region76: #{tpu_custom_call.1} parent=43 // pred_fallthru
          _
        %s711 = sand.u32 %s232, 1
        %s712 = scalar_lea.sflag [#allocation7], %s711
        %s713 = sand.u32 %s232, 1
        %s714 = smul.addr %s713, 8
        %s715 = scalar_lea.vmem [#allocation13], %s714
        // Predicated region
        $region77: #{tpu_custom_call.1} parent=43 // pred_check
          %p716 = pneg %p242
        $region78: #{tpu_custom_call.1} parent=43 // pred_check_branch
          %718 = sbr.rel (%p716) target = $region80
        $region79: #{tpu_custom_call.1} parent=43 // pred_region
          %s719 = ssub.s32 %s36, 4
          %p720 = scmp.gt.s32.totalorder %s719, 0
          %s721 = scalar_select %p720, %s719, 0
          %s723 = ssub.s32 128, 128
          %724 = vsyncadd %s712, %s723
          %s725 = smul.addr %s35, 4
          %s726 = sadd.s32 %s721, %s725
          %s727 = smul.addr %s726, 128
          %s728 = scalar_lea.hbm %s7, %s727
          %s730 = sshll.u32 %s715, 4
          %s731 = int_to_ptr.vmem [resolvable:$true] %s730
          %733 = dma.vmem_to_hbm [thread:$0]  %s731, 128, %s728, %s712
        $region80: #{tpu_custom_call.1} parent=43 // pred_fallthru
          _
      $region44: #{tpu_custom_call.1} parent=5 // pred_fallthru
        _
      %p734 = scmp.le.s32.totalorder 2, %s26
      // Predicated region
      $region81: #{tpu_custom_call.1} parent=5 // pred_check
        %p735 = pneg %p734
      $region82: #{tpu_custom_call.1} parent=5 // pred_check_branch
        %737 = sbr.rel (%p735) target = $region84
      $region83: #{tpu_custom_call.1} parent=5 // pred_region
        %s738 = ssub.s32 %s26, 2
        // Predicated region
        $region85: #{tpu_custom_call.1} parent=83 // pred_check
          %p739 = pneg %p248
        $region86: #{tpu_custom_call.1} parent=83 // pred_check_branch
          %741 = sbr.rel (%p739) target = $region88
        $region87: #{tpu_custom_call.1} parent=83 // pred_region
          %s742 = sand.u32 %s233, 1
          %s743 = scalar_lea.sflag [#allocation7], %s742
          %s744 = sand.u32 %s233, 1
          %s745 = smul.addr %s744, 8
          %s746 = scalar_lea.vmem [#allocation13], %s745
          %747 = dma.done %s743, 128
        $region88: #{tpu_custom_call.1} parent=83 // pred_fallthru
          _
      $region84: #{tpu_custom_call.1} parent=5 // pred_fallthru
        _
    $region6: #{tpu_custom_call.1} parent=1 // loop_footer
      %s30 = sadd.s32 1, %s26
    $region7: #{tpu_custom_call.1} parent=1 // loop_footer_branch
      %25 = sbr.rel target = $region3
    $region8: #{tpu_custom_call.1} parent=1 // loop_exit
      _
    %748 = vsyncpa [#allocation6], 1
    %s749 = scalar_lea.sflag [#allocation6], 1
    %750 = vsyncpa %s749, 1
    %751 = vsyncpa [#allocation9], 1
    %s752 = scalar_lea.sflag [#allocation9], 1
    %753 = vsyncpa %s752, 1
    %754 = vsyncpa [#allocation12], 1
    %s755 = scalar_lea.sflag [#allocation12], 1
    %756 = vsyncpa %s755, 1
    %757 = vsyncpa [#allocation7], 1
    %s758 = scalar_lea.sflag [#allocation7], 1
    %759 = vsyncpa %s758, 1

</llo_original>
